<compile_context>
chip_gen: v6e
topology: v6e:2x2x1
jax: 0.10.0
libtpu: 0.0.40
codegen_flags: <defaults>
</compile_context>

<pallas_src>
import jax
import jax.numpy as jnp
from jax.experimental import pallas as pl
from jax.experimental.pallas import tpu as pltpu


def _round_up(x, m):
    return ((x + m - 1) // m) * m


def _cdiv(a, b):
    return -(-a // b)


def _critic_kernel(sa_ref, w1_ref, w2_ref, w3_ref, aux_ref, q_ref):
    f32 = jnp.float32

    # aux rows: 0 -> b1 (tiled fold x), 1 -> b2 (tiled fold x), 2 -> b3 (broadcast)
    b1 = aux_ref[0:1, :]
    b2 = aux_ref[1:2, :]
    b3 = aux_ref[2:3, 0:1]

    # Layer 1: lane-dense block-diagonal matmul, f32 accumulate, f32 bias+ReLU.
    h1 = jnp.dot(sa_ref[...], w1_ref[...], preferred_element_type=f32) + b1
    h1 = jnp.maximum(h1, 0.0)

    # Layer 2: block-diagonal Linear + ReLU (cast to compute dtype for the MXU).
    h2 = jnp.dot(h1.astype(w2_ref.dtype), w2_ref[...], preferred_element_type=f32) + b2
    h2 = jnp.maximum(h2, 0.0)

    # Head: Linear(H,1) per folded slot via block-diagonal [fold*H, fold] (kept f32).
    q = jnp.dot(h2, w3_ref[...], preferred_element_type=f32) + b3
    q_ref[...] = q.astype(q_ref.dtype)


def _vmem_cap_and_floor():
    """(max scoped VMEM we allow ourselves, platform scoped-VMEM default)."""
    kind = ""
    try:
        kind = jax.devices()[0].device_kind.lower()
    except Exception:
        pass
    if "v6" in kind:
        return 96 << 20, 32 << 20      # 128 MiB physical, 32 MiB scoped default
    if "v5" in kind or "v4" in kind:
        return 96 << 20, 16 << 20      # 128 MiB physical, 16 MiB scoped default
    return 44 << 20, 32 << 20          # v7x / unknown: only 64 MiB physical


def _vmem_need_bytes(TBf, lane_sa, fH, fold, cd):
    """Padded (sublane x 128-lane) VMEM footprint estimate for one kernel config."""
    it = jnp.dtype(cd).itemsize
    sub = 16 if it == 2 else 8
    r = _round_up
    # Batch-tiled streams, double-buffered by the pipeline.
    sa_tile = r(TBf, sub) * r(lane_sa, 128) * it
    q_tile = r(TBf, 8) * r(fold, 128) * 4
    # Resident weights / packed biases (assume 2 buffers each -- conservative).
    w1b = r(lane_sa, sub) * r(fH, 128) * it
    w2b = r(fH, sub) * r(fH, 128) * it
    w3b = r(fH, 8) * r(fold, 128) * 4
    auxb = r(3, 8) * r(fH, 128) * 4
    # In-kernel f32 temporaries (layer-1/2 activations, cast copies) -- generous.
    temps = 4 * r(TBf, sub) * r(fH, 128) * 4
    return 2 * (sa_tile + q_tile) + 2 * (w1b + w2b + w3b + auxb) + temps + (2 << 20)


def critic_forward(state, action, params, *, compute_dtype=jnp.bfloat16, block_b=65536):
    """Pallas Critic forward.  state: [B, Ds], action: [B, Da] -> q: [B, 1] (f32)."""
    B, Ds = state.shape
    Da = action.shape[1]
    w1, b1, w2, b2, w3, b3 = params
    in_dim, H = w1.shape
    assert in_dim == Ds + Da, "w1 must have shape [Ds+Da, H]"

    cd = jnp.dtype(compute_dtype)
    f32 = jnp.float32

    # ---- choose the lane-fold factor: fold rows of in_pad lanes fill 128 lanes ----
    fold = 1
    if in_dim <= 128:
        for f in (128, 64, 32, 16, 8, 4, 2):
            if in_dim * f <= 128 and f * H <= 1024:
                fold = f
                break
    in_pad = (128 // fold) if fold > 1 else in_dim
    lane_sa = fold * in_pad        # lane width of the folded sa stream (128 typically)
    fH = fold * H                  # lane width of the folded hidden activations

    # ---- block-diagonal weights + packed biases (built once in the wrapper) ----
    eye = jnp.eye(fold, dtype=f32)
    w1_pad = jnp.pad(w1.astype(f32), ((0, in_pad - in_dim), (0, 0)))
    w1_blk = jnp.kron(eye, w1_pad).astype(cd)                       # [lane_sa, fH]
    w2_blk = jnp.kron(eye, w2.astype(f32)).astype(cd)               # [fH, fH]
    w3_blk = jnp.kron(eye, jnp.reshape(w3, (H, 1)).astype(f32))     # [fH, fold] (f32 head)
    aux = jnp.stack([
        jnp.tile(jnp.reshape(b1, (H,)).astype(f32), fold),
        jnp.tile(jnp.reshape(b2, (H,)).astype(f32), fold),
        jnp.full((fH,), jnp.reshape(b3, ()).astype(f32)),
    ], axis=0)                                                      # [3, fH] f32

    # ---- batch tiling on folded rows ----
    sub = 16 if cd.itemsize == 2 else 8
    Bf_raw = _cdiv(B, fold)
    TBf = max(sub, _round_up(_cdiv(int(block_b), fold), sub))
    # Guarantee >=2 grid steps when possible (v7x megacore sharding of the batch axis).
    TBf = min(TBf, max(sub, _round_up(_cdiv(Bf_raw, 2), sub)))

    cap, floor = _vmem_cap_and_floor()
    need = _vmem_need_bytes(TBf, lane_sa, fH, fold, cd)
    while need > int(0.9 * cap) and TBf > sub:
        TBf = max(sub, _round_up(TBf // 2, sub))
        need = _vmem_need_bytes(TBf, lane_sa, fH, fold, cd)
    # Never set the limit below the platform default; grant the full cap otherwise.
    vmem_limit = int(cap) if need > floor else None

    Bf = _round_up(Bf_raw, TBf)
    Bp = Bf * fold

    # ---- fold the batch into the lane axis (concat is fused with the dtype cast) ----
    sa = jnp.concatenate([state, action], axis=-1).astype(cd)       # [B, in_dim]
    sa = jnp.pad(sa, ((0, Bp - B), (0, in_pad - in_dim)))           # [Bp, in_pad]
    sa_f = jnp.reshape(sa, (Bf, lane_sa))                           # [Bf, fold*in_pad]

    grid = (Bf // TBf,)

    out = pl.pallas_call(
        _critic_kernel,
        out_shape=jax.ShapeDtypeStruct((Bf, fold), jnp.float32),
        grid=grid,
        in_specs=[
            pl.BlockSpec((TBf, lane_sa), lambda i: (i, 0)),   # folded sa tile
            pl.BlockSpec((lane_sa, fH), lambda i: (0, 0)),    # W1_blk (resident)
            pl.BlockSpec((fH, fH), lambda i: (0, 0)),         # W2_blk (resident)
            pl.BlockSpec((fH, fold), lambda i: (0, 0)),       # W3_blk (resident, f32)
            pl.BlockSpec((3, fH), lambda i: (0, 0)),          # packed b1/b2/b3
        ],
        out_specs=pl.BlockSpec((TBf, fold), lambda i: (i, 0)),
        compiler_params=pltpu.CompilerParams(
            dimension_semantics=("parallel",),
            vmem_limit_bytes=vmem_limit,
        ),
    )(sa_f, w1_blk, w2_blk, w3_blk, aux)

    # [Bf, fold] row-major == batch order; unfold and drop padded rows.
    return jnp.reshape(out, (Bp, 1))[:B]


def init_params(key, in_dim, hidden_dim):
    """Deterministic synthetic parameters (shapes match the MLP in __init__)."""
    ks = jax.random.split(key, 6)
    scale = 0.1
    w1 = scale * jax.random.normal(ks[0], (in_dim, hidden_dim), jnp.float32)
    b1 = scale * jax.random.normal(ks[1], (1, hidden_dim), jnp.float32)
    w2 = scale * jax.random.normal(ks[2], (hidden_dim, hidden_dim), jnp.float32)
    b2 = scale * jax.random.normal(ks[3], (1, hidden_dim), jnp.float32)
    w3 = scale * jax.random.normal(ks[4], (hidden_dim, 1), jnp.float32)
    b3 = scale * jax.random.normal(ks[5], (1, 1), jnp.float32)
    return (w1, b1, w2, b2, w3, b3)


def critic_ref(state, action, params):
    """Pure-JAX reference (original concat-based math) for correctness checks."""
    w1, b1, w2, b2, w3, b3 = params
    sa = jnp.concatenate([state, action], axis=-1)
    h1 = jnp.maximum(sa @ w1 + b1, 0.0)
    h2 = jnp.maximum(h1 @ w2 + b2, 0.0)
    return h2 @ w3 + b3


if __name__ == "__main__":
    state_dim = 12
    action_dim = 4
    in_dim = state_dim + action_dim
    hidden_dim = 32

    key = jax.random.PRNGKey(0)
    k_s, k_a, k_p, k_s2, k_a2 = jax.random.split(key, 5)
    params = init_params(k_p, in_dim, hidden_dim)

    # --- small batch, f32 path (strict correctness) ---
    batch = 8
    state = jax.random.normal(k_s, (batch, state_dim), jnp.float32)
    action = jax.random.normal(k_a, (batch, action_dim), jnp.float32)

    q = critic_forward(state, action, params, compute_dtype=jnp.float32)
    q = jax.block_until_ready(q)
    q_ref = critic_ref(state, action, params)
    assert q.shape == (batch, 1)
    assert jnp.allclose(q, q_ref, atol=1e-4, rtol=1e-5), "f32 mismatch vs reference"

    # --- larger, non-multiple batch exercising grid > 1, padding, fold reshape (f32) ---
    batch2 = 100
    state2 = jax.random.normal(k_s2, (batch2, state_dim), jnp.float32)
    action2 = jax.random.normal(k_a2, (batch2, action_dim), jnp.float32)
    q2 = critic_forward(state2, action2, params, compute_dtype=jnp.float32, block_b=32)
    q2 = jax.block_until_ready(q2)
    q2_ref = critic_ref(state2, action2, params)
    assert q2.shape == (batch2, 1)
    assert jnp.allclose(q2, q2_ref, atol=1e-4, rtol=1e-5), "tiled f32 mismatch"

    # --- default bf16-in / f32-accumulate path (looser tolerance) ---
    q3 = critic_forward(state2, action2, params, block_b=64)
    q3 = jax.block_until_ready(q3)
    assert q3.shape == (batch2, 1)
    assert jnp.allclose(q3, q2_ref, atol=5e-2, rtol=5e-2), "bf16 mismatch vs reference"

    print("KERNEL_OK")
</pallas_src>

<mosaic_0001>
module attributes {stable_mosaic.version = 11 : i64} {
  func.func @_critic_kernel(%arg0: i32, %arg1: memref<8x128xf32, #tpu.memory_space<vmem>>, %arg2: memref<128x256xf32, #tpu.memory_space<vmem>>, %arg3: memref<256x256xf32, #tpu.memory_space<vmem>>, %arg4: memref<256x8xf32, #tpu.memory_space<vmem>>, %arg5: memref<3x256xf32, #tpu.memory_space<vmem>>, %arg6: memref<8x8xf32, #tpu.memory_space<vmem>>) attributes {dimension_semantics = [#tpu.dimension_semantics<parallel>], iteration_bounds = array<i64: 1>, scalar_prefetch = 0 : i64, scratch_operands = 0 : i64, tpu.core_type = #tpu.core_type<tc>, window_params = [{transform_indices = @transform_0, window_bounds = array<i64: 8, 128>}, {pipeline_mode = #tpu.pipeline_mode<synchronous>, transform_indices = @transform_1, window_bounds = array<i64: 128, 256>}, {pipeline_mode = #tpu.pipeline_mode<synchronous>, transform_indices = @transform_2, window_bounds = array<i64: 256, 256>}, {pipeline_mode = #tpu.pipeline_mode<synchronous>, transform_indices = @transform_3, window_bounds = array<i64: 256, 8>}, {pipeline_mode = #tpu.pipeline_mode<synchronous>, transform_indices = @transform_4, window_bounds = array<i64: 3, 256>}, {transform_indices = @transform_5, window_bounds = array<i64: 8, 8>}]} {
    %c0 = arith.constant 0 : index
    %c0_0 = arith.constant 0 : index
    %0 = vector.load %arg5[%c0, %c0_0] : memref<3x256xf32, #tpu.memory_space<vmem>>, vector<1x256xf32>
    %c1 = arith.constant 1 : index
    %c0_1 = arith.constant 0 : index
    %1 = vector.load %arg5[%c1, %c0_1] : memref<3x256xf32, #tpu.memory_space<vmem>>, vector<1x256xf32>
    %c2 = arith.constant 2 : index
    %c0_2 = arith.constant 0 : index
    %2 = vector.load %arg5[%c2, %c0_2] : memref<3x256xf32, #tpu.memory_space<vmem>>, vector<1x1xf32>
    %c0_3 = arith.constant 0 : index
    %c0_4 = arith.constant 0 : index
    %3 = vector.load %arg1[%c0_3, %c0_4] : memref<8x128xf32, #tpu.memory_space<vmem>>, vector<8x128xf32>
    %c0_5 = arith.constant 0 : index
    %c0_6 = arith.constant 0 : index
    %4 = vector.load %arg2[%c0_5, %c0_6] : memref<128x256xf32, #tpu.memory_space<vmem>>, vector<128x256xf32>
    %cst = arith.constant dense<0.000000e+00> : vector<8x256xf32>
    %5 = tpu.matmul %3, %4, %cst {dimension_numbers = #tpu.dot_dimension_numbers<[1], [0], [0], [1], [0, 0, 1, 1], [], []>} : vector<8x128xf32>, vector<128x256xf32>, vector<8x256xf32> -> vector<8x256xf32>
    %6 = vector.broadcast %0 : vector<1x256xf32> to vector<8x256xf32>
    %7 = arith.addf %5, %6 : vector<8x256xf32>
    %cst_7 = arith.constant 0.000000e+00 : f32
    %8 = vector.broadcast %cst_7 : f32 to vector<8x256xf32>
    %9 = arith.maximumf %7, %8 : vector<8x256xf32>
    %c0_8 = arith.constant 0 : index
    %c0_9 = arith.constant 0 : index
    %10 = vector.load %arg3[%c0_8, %c0_9] : memref<256x256xf32, #tpu.memory_space<vmem>>, vector<256x256xf32>
    %cst_10 = arith.constant dense<0.000000e+00> : vector<8x256xf32>
    %11 = tpu.matmul %9, %10, %cst_10 {dimension_numbers = #tpu.dot_dimension_numbers<[1], [0], [0], [1], [0, 0, 1, 1], [], []>} : vector<8x256xf32>, vector<256x256xf32>, vector<8x256xf32> -> vector<8x256xf32>
    %12 = vector.broadcast %1 : vector<1x256xf32> to vector<8x256xf32>
    %13 = arith.addf %11, %12 : vector<8x256xf32>
    %cst_11 = arith.constant 0.000000e+00 : f32
    %14 = vector.broadcast %cst_11 : f32 to vector<8x256xf32>
    %15 = arith.maximumf %13, %14 : vector<8x256xf32>
    %c0_12 = arith.constant 0 : index
    %c0_13 = arith.constant 0 : index
    %16 = vector.load %arg4[%c0_12, %c0_13] : memref<256x8xf32, #tpu.memory_space<vmem>>, vector<256x8xf32>
    %cst_14 = arith.constant dense<0.000000e+00> : vector<8x8xf32>
    %17 = tpu.matmul %15, %16, %cst_14 {dimension_numbers = #tpu.dot_dimension_numbers<[1], [0], [0], [1], [0, 0, 1, 1], [], []>} : vector<8x256xf32>, vector<256x8xf32>, vector<8x8xf32> -> vector<8x8xf32>
    %18 = vector.broadcast %2 : vector<1x1xf32> to vector<8x8xf32>
    %19 = arith.addf %17, %18 : vector<8x8xf32>
    %c0_15 = arith.constant 0 : index
    %c0_16 = arith.constant 0 : index
    %20 = vector.load %arg6[%c0_15, %c0_16] : memref<8x8xf32, #tpu.memory_space<vmem>>, vector<8x8xf32>
    tpu.vector_store %arg6[%c0_15, %c0_16], %19 {strides = array<i32>} : memref<8x8xf32, #tpu.memory_space<vmem>>, vector<8x8xf32>,
    return
  }
  func.func @transform_0(%arg0: i32) -> (i32, i32) {
    %c0_i32 = arith.constant 0 : i32
    %c0_i32_0 = arith.constant 0 : i32
    return %arg0, %c0_i32 : i32, i32
  }
  func.func @transform_1(%arg0: i32) -> (i32, i32) {
    %c0_i32 = arith.constant 0 : i32
    %c0_i32_0 = arith.constant 0 : i32
    %c0_i32_1 = arith.constant 0 : i32
    return %c0_i32, %c0_i32_0 : i32, i32
  }
  func.func @transform_2(%arg0: i32) -> (i32, i32) {
    %c0_i32 = arith.constant 0 : i32
    %c0_i32_0 = arith.constant 0 : i32
    %c0_i32_1 = arith.constant 0 : i32
    return %c0_i32, %c0_i32_0 : i32, i32
  }
  func.func @transform_3(%arg0: i32) -> (i32, i32) {
    %c0_i32 = arith.constant 0 : i32
    %c0_i32_0 = arith.constant 0 : i32
    %c0_i32_1 = arith.constant 0 : i32
    return %c0_i32, %c0_i32_0 : i32, i32
  }
  func.func @transform_4(%arg0: i32) -> (i32, i32) {
    %c0_i32 = arith.constant 0 : i32
    %c0_i32_0 = arith.constant 0 : i32
    %c0_i32_1 = arith.constant 0 : i32
    return %c0_i32, %c0_i32_0 : i32, i32
  }
  func.func @transform_5(%arg0: i32) -> (i32, i32) {
    %c0_i32 = arith.constant 0 : i32
    %c0_i32_0 = arith.constant 0 : i32
    return %arg0, %c0_i32 : i32, i32
  }
}

</mosaic_0001>

<llo_original>
// kernel: tpu_custom_call.1
$region0: #{tpu_custom_call.1}
  #allocation0 [shape = 'u32[]', space=smem, size = 0x4, offset = 0x4, fixed_abs, tag = 'smem constant byte address 0x4 - core index']
  #allocation1 [shape = 'u32[144,128]{1,0:T(1,128)}', space=vmem, size = 0x12000, scoped, tag = 'internal scratch']
  %s0 = inlined_call_operand.vmem [shape: f32[8,128], index: 0, kind: input, shape index: {}]
  %s1 = inlined_call_operand.vmem [shape: f32[128,256], index: 1, kind: input, shape index: {}]
  %s2 = inlined_call_operand.hbm [shape: f32[256,256], index: 2, kind: input, shape index: {}]
  %s3 = inlined_call_operand.vmem [shape: f32[256,8], index: 3, kind: input, shape index: {}]
  %s4 = inlined_call_operand.vmem [shape: f32[3,256], index: 4, kind: input, shape index: {}]
  %s5 = inlined_call_operand.hbm [shape: f32[8,8], index: 5, kind: output, shape index: {}]
  %s6 = sld [smem:[#allocation0]]
  $region34: #{tpu_custom_call.1} parent=0
    _
  %s8 = ssub.s32 1, %s6
  %s9 = scalar_select 0, %s8, %s6
  $region1: #{tpu_custom_call.1} parent=0
    #allocation2 [shape = 'u8[262144]{0}', space=vmem, size = 0x40000, scoped, tag = 'input window, operand 2, single buffered']
    #allocation3 [shape = 's32[1]{0}', space=sflag, size = 0x4, scoped, tag = 'scoped memory for tpu_custom_call.1']
    #allocation4 [shape = 's32[1]{0}', space=sflag, size = 0x4, scoped, tag = 'scoped memory for tpu_custom_call.1']
    #allocation5 [shape = 'u8[4096]{0}', space=vmem, size = 0x1000, scoped, tag = 'output window, operand 0, single buffered']
    %10 = vsyncpa [#allocation3], 0
    %11 = vsyncpa [#allocation4], 0
    // Predicated region
    $region2: #{tpu_custom_call.1} parent=1 // pred_check
      _
    $region3: #{tpu_custom_call.1} parent=1 // pred_check_branch
      %13 = sbr.rel (0) target = $region5
    $region4: #{tpu_custom_call.1} parent=1 // pred_region
      _
    $region5: #{tpu_custom_call.1} parent=1 // pred_fallthru
      _
    // Predicated region
    $region6: #{tpu_custom_call.1} parent=1 // pred_check
      _
    $region7: #{tpu_custom_call.1} parent=1 // pred_check_branch
      %15 = sbr.rel (0) target = $region9
    $region8: #{tpu_custom_call.1} parent=1 // pred_region
      _
    $region9: #{tpu_custom_call.1} parent=1 // pred_fallthru
      _
    // Predicated region
    $region10: #{tpu_custom_call.1} parent=1 // pred_check
      _
    $region11: #{tpu_custom_call.1} parent=1 // pred_check_branch
      %17 = sbr.rel (0) target = $region13
    $region12: #{tpu_custom_call.1} parent=1 // pred_region
      %s19 = ssub.s32 8192, 8192
      %20 = vsyncadd [#allocation3], %s19
      %s21 = sshll.u32 [#allocation2], 4
      %s22 = int_to_ptr.vmem [resolvable:$true] %s21
      %27 = dma.hbm_to_vmem [thread:$0]  %s2, 8192, %s22, [#allocation3], 256, 256, 16
    $region13: #{tpu_custom_call.1} parent=1 // pred_fallthru
      _
    // Predicated region
    $region14: #{tpu_custom_call.1} parent=1 // pred_check
      _
    $region15: #{tpu_custom_call.1} parent=1 // pred_check_branch
      %29 = sbr.rel (0) target = $region17
    $region16: #{tpu_custom_call.1} parent=1 // pred_region
      _
    $region17: #{tpu_custom_call.1} parent=1 // pred_fallthru
      _
    // Predicated region
    $region18: #{tpu_custom_call.1} parent=1 // pred_check
      _
    $region19: #{tpu_custom_call.1} parent=1 // pred_check_branch
      %31 = sbr.rel (0) target = $region21
    $region20: #{tpu_custom_call.1} parent=1 // pred_region
      _
    $region21: #{tpu_custom_call.1} parent=1 // pred_fallthru
      _
    // Predicated region
    $region22: #{tpu_custom_call.1} parent=1 // pred_check
      _
    $region23: #{tpu_custom_call.1} parent=1 // pred_check_branch
      %33 = sbr.rel (0) target = $region25
    $region24: #{tpu_custom_call.1} parent=1 // pred_region
      %34 = dma.done [#allocation3], 8192
    $region25: #{tpu_custom_call.1} parent=1 // pred_fallthru
      _
    %v35 = vld [vmem:[%s4] ss:$4 sm:$0x3]
    %s36 = scalar_lea.vmem %s4, 1
    %v37 = vld [vmem:[%s36] ss:$4 sm:$0x3]
    %v38 = vld [vmem:[%s4 + $0x2] sm:$0x1]
    %v39 = vld [vmem:[%s0] sm:$0xff]
    %v40 = vld [vmem:[%s1] sm:$0xff]
    %v41 = vld [vmem:[%s1 + $0x8] sm:$0xff]
    %v42 = vld [vmem:[%s1 + $0x10] sm:$0xff]
    %v43 = vld [vmem:[%s1 + $0x18] sm:$0xff]
    %v44 = vld [vmem:[%s1 + $0x20] sm:$0xff]
    %v45 = vld [vmem:[%s1 + $0x28] sm:$0xff]
    %v46 = vld [vmem:[%s1 + $0x30] sm:$0xff]
    %v47 = vld [vmem:[%s1 + $0x38] sm:$0xff]
    %v48 = vld [vmem:[%s1 + $0x40] sm:$0xff]
    %v49 = vld [vmem:[%s1 + $0x48] sm:$0xff]
    %v50 = vld [vmem:[%s1 + $0x50] sm:$0xff]
    %v51 = vld [vmem:[%s1 + $0x58] sm:$0xff]
    %v52 = vld [vmem:[%s1 + $0x60] sm:$0xff]
    %v53 = vld [vmem:[%s1 + $0x68] sm:$0xff]
    %v54 = vld [vmem:[%s1 + $0x70] sm:$0xff]
    %v55 = vld [vmem:[%s1 + $0x78] sm:$0xff]
    %v56 = vld [vmem:[%s1 + $0x80] sm:$0xff]
    %v57 = vld [vmem:[%s1 + $0x88] sm:$0xff]
    %v58 = vld [vmem:[%s1 + $0x90] sm:$0xff]
    %v59 = vld [vmem:[%s1 + $0x98] sm:$0xff]
    %v60 = vld [vmem:[%s1 + $0xa0] sm:$0xff]
    %v61 = vld [vmem:[%s1 + $0xa8] sm:$0xff]
    %v62 = vld [vmem:[%s1 + $0xb0] sm:$0xff]
    %v63 = vld [vmem:[%s1 + $0xb8] sm:$0xff]
    %v64 = vld [vmem:[%s1 + $0xc0] sm:$0xff]
    %v65 = vld [vmem:[%s1 + $0xc8] sm:$0xff]
    %v66 = vld [vmem:[%s1 + $0xd0] sm:$0xff]
    %v67 = vld [vmem:[%s1 + $0xd8] sm:$0xff]
    %v68 = vld [vmem:[%s1 + $0xe0] sm:$0xff]
    %v69 = vld [vmem:[%s1 + $0xe8] sm:$0xff]
    %v70 = vld [vmem:[%s1 + $0xf0] sm:$0xff]
    %v71 = vld [vmem:[%s1 + $0xf8] sm:$0xff]
    %v73 = vlaneseq
    %v74 = vshrl.u32 %v73, 7
    %v75 = vsub.s32 0, %v74
    %v76 = vrot.slane %v35, %v75
    %v77 = vlaneseq
    %v78 = vshrl.u32 %v77, 7
    %v79 = vsub.s32 1, %v78
    %v80 = vrot.slane %v35, %v79
    %83 = vmatprep.subr.mxu0 %v71
    %84 = vmatpush1.msra.mxu0 %v70
    %85 = vmatprep.subr.mxu0 %v69
    %86 = vmatpush1.msra.mxu0 %v68
    %87 = vmatprep.subr.mxu0 %v67
    %88 = vmatpush1.msra.mxu0 %v66
    %89 = vmatprep.subr.mxu0 %v65
    %90 = vmatpush1.msra.mxu0 %v64
    %91 = vmatprep.subr.mxu0 %v63
    %92 = vmatpush1.msra.mxu0 %v62
    %93 = vmatprep.subr.mxu0 %v61
    %94 = vmatpush1.msra.mxu0 %v60
    %95 = vmatprep.subr.mxu0 %v59
    %96 = vmatpush1.msra.mxu0 %v58
    %97 = vmatprep.subr.mxu0 %v57
    %98 = vmatpush1.msra.mxu0 %v56
    %99 = vmatprep.subr.mxu0 %v55
    %100 = vmatpush1.msra.mxu0 %v54
    %101 = vmatprep.subr.mxu0 %v53
    %102 = vmatpush1.msra.mxu0 %v52
    %103 = vmatprep.subr.mxu0 %v51
    %104 = vmatpush1.msra.mxu0 %v50
    %105 = vmatprep.subr.mxu0 %v49
    %106 = vmatpush1.msra.mxu0 %v48
    %107 = vmatprep.subr.mxu0 %v47
    %108 = vmatpush1.msra.mxu0 %v46
    %109 = vmatprep.subr.mxu0 %v45
    %110 = vmatpush1.msra.mxu0 %v44
    %111 = vmatprep.subr.mxu0 %v43
    %112 = vmatpush1.msra.mxu0 %v42
    %113 = vmatprep.subr.mxu0 %v41
    %114 = vmatpush1.msra.mxu0 %v40
    %115 = vmatprep.subr.mxu0 0.0
    %116 = vmatpush2.msra.mxu0 0.0
    %117 = vmatprep.subr.mxu0 0.0
    %118 = vmatpush2.msra.mxu0 0.0
    %119 = vmatprep.subr.mxu0 0.0
    %120 = vmatpush2.msra.mxu0 0.0
    %121 = vmatprep.subr.mxu0 0.0
    %122 = vmatpush2.msra.mxu0 0.0
    %123 = vmatprep.subr.mxu0 0.0
    %124 = vmatpush2.msra.mxu0 0.0
    %125 = vmatprep.subr.mxu0 0.0
    %126 = vmatpush2.msra.mxu0 0.0
    %127 = vmatprep.subr.mxu0 0.0
    %128 = vmatpush2.msra.mxu0 0.0
    %129 = vmatprep.subr.mxu0 0.0
    %130 = vmatpush2.msra.mxu0 0.0
    %131 = vmatprep.subr.mxu0 0.0
    %132 = vmatpush2.msra.mxu0 0.0
    %133 = vmatprep.subr.mxu0 0.0
    %134 = vmatpush2.msra.mxu0 0.0
    %135 = vmatprep.subr.mxu0 0.0
    %136 = vmatpush2.msra.mxu0 0.0
    %137 = vmatprep.subr.mxu0 0.0
    %138 = vmatpush2.msra.mxu0 0.0
    %139 = vmatprep.subr.mxu0 0.0
    %140 = vmatpush2.msra.mxu0 0.0
    %141 = vmatprep.subr.mxu0 0.0
    %142 = vmatpush2.msra.mxu0 0.0
    %143 = vmatprep.subr.mxu0 0.0
    %144 = vmatpush2.msra.mxu0 0.0
    %145 = vmatprep.subr.mxu0 0.0
    %146 = vmatpush2.msra.mxu0 0.0
    %147 = vmatprep.mubr.f32.mxu0 0.0
    %148 = vmatmul.mubr.f32.gmra.mxu0 %v39
    %v149 = vpop.f32.mrf.mxu0
    %v150 = vadd.f32 %v76, %v149
    %v151 = vpop.f32.mrf.mxu0
    %v152 = vadd.f32 %v80, %v151
    %153 = vdwg.mxu0
    %v154 = vmax.f32 %v150, 0.0
    %v155 = vmax.f32 %v152, 0.0
    %v156 = vld [vmem:[#allocation2] sm:$0xff]
    %v157 = vld [vmem:[#allocation2 + $0x8] sm:$0xff]
    %v158 = vld [vmem:[#allocation2 + $0x10] sm:$0xff]
    %v159 = vld [vmem:[#allocation2 + $0x18] sm:$0xff]
    %v160 = vld [vmem:[#allocation2 + $0x20] sm:$0xff]
    %v161 = vld [vmem:[#allocation2 + $0x28] sm:$0xff]
    %v162 = vld [vmem:[#allocation2 + $0x30] sm:$0xff]
    %v163 = vld [vmem:[#allocation2 + $0x38] sm:$0xff]
    %v164 = vld [vmem:[#allocation2 + $0x40] sm:$0xff]
    %v165 = vld [vmem:[#allocation2 + $0x48] sm:$0xff]
    %v166 = vld [vmem:[#allocation2 + $0x50] sm:$0xff]
    %v167 = vld [vmem:[#allocation2 + $0x58] sm:$0xff]
    %v168 = vld [vmem:[#allocation2 + $0x60] sm:$0xff]
    %v169 = vld [vmem:[#allocation2 + $0x68] sm:$0xff]
    %v170 = vld [vmem:[#allocation2 + $0x70] sm:$0xff]
    %v171 = vld [vmem:[#allocation2 + $0x78] sm:$0xff]
    %v172 = vld [vmem:[#allocation2 + $0x80] sm:$0xff]
    %v173 = vld [vmem:[#allocation2 + $0x88] sm:$0xff]
    %v174 = vld [vmem:[#allocation2 + $0x90] sm:$0xff]
    %v175 = vld [vmem:[#allocation2 + $0x98] sm:$0xff]
    %v176 = vld [vmem:[#allocation2 + $0xa0] sm:$0xff]
    %v177 = vld [vmem:[#allocation2 + $0xa8] sm:$0xff]
    %v178 = vld [vmem:[#allocation2 + $0xb0] sm:$0xff]
    %v179 = vld [vmem:[#allocation2 + $0xb8] sm:$0xff]
    %v180 = vld [vmem:[#allocation2 + $0xc0] sm:$0xff]
    %v181 = vld [vmem:[#allocation2 + $0xc8] sm:$0xff]
    %v182 = vld [vmem:[#allocation2 + $0xd0] sm:$0xff]
    %v183 = vld [vmem:[#allocation2 + $0xd8] sm:$0xff]
    %v184 = vld [vmem:[#allocation2 + $0xe0] sm:$0xff]
    %v185 = vld [vmem:[#allocation2 + $0xe8] sm:$0xff]
    %v186 = vld [vmem:[#allocation2 + $0xf0] sm:$0xff]
    %v187 = vld [vmem:[#allocation2 + $0xf8] sm:$0xff]
    %v188 = vld [vmem:[#allocation2 + $0x100] sm:$0xff]
    %v189 = vld [vmem:[#allocation2 + $0x108] sm:$0xff]
    %v190 = vld [vmem:[#allocation2 + $0x110] sm:$0xff]
    %v191 = vld [vmem:[#allocation2 + $0x118] sm:$0xff]
    %v192 = vld [vmem:[#allocation2 + $0x120] sm:$0xff]
    %v193 = vld [vmem:[#allocation2 + $0x128] sm:$0xff]
    %v194 = vld [vmem:[#allocation2 + $0x130] sm:$0xff]
    %v195 = vld [vmem:[#allocation2 + $0x138] sm:$0xff]
    %v196 = vld [vmem:[#allocation2 + $0x140] sm:$0xff]
    %v197 = vld [vmem:[#allocation2 + $0x148] sm:$0xff]
    %v198 = vld [vmem:[#allocation2 + $0x150] sm:$0xff]
    %v199 = vld [vmem:[#allocation2 + $0x158] sm:$0xff]
    %v200 = vld [vmem:[#allocation2 + $0x160] sm:$0xff]
    %v201 = vld [vmem:[#allocation2 + $0x168] sm:$0xff]
    %v202 = vld [vmem:[#allocation2 + $0x170] sm:$0xff]
    %v203 = vld [vmem:[#allocation2 + $0x178] sm:$0xff]
    %v204 = vld [vmem:[#allocation2 + $0x180] sm:$0xff]
    %v205 = vld [vmem:[#allocation2 + $0x188] sm:$0xff]
    %v206 = vld [vmem:[#allocation2 + $0x190] sm:$0xff]
    %v207 = vld [vmem:[#allocation2 + $0x198] sm:$0xff]
    %v208 = vld [vmem:[#allocation2 + $0x1a0] sm:$0xff]
    %v209 = vld [vmem:[#allocation2 + $0x1a8] sm:$0xff]
    %v210 = vld [vmem:[#allocation2 + $0x1b0] sm:$0xff]
    %v211 = vld [vmem:[#allocation2 + $0x1b8] sm:$0xff]
    %v212 = vld [vmem:[#allocation2 + $0x1c0] sm:$0xff]
    %v213 = vld [vmem:[#allocation2 + $0x1c8] sm:$0xff]
    %v214 = vld [vmem:[#allocation2 + $0x1d0] sm:$0xff]
    %v215 = vld [vmem:[#allocation2 + $0x1d8] sm:$0xff]
    %v216 = vld [vmem:[#allocation2 + $0x1e0] sm:$0xff]
    %v217 = vld [vmem:[#allocation2 + $0x1e8] sm:$0xff]
    %v218 = vld [vmem:[#allocation2 + $0x1f0] sm:$0xff]
    %v219 = vld [vmem:[#allocation2 + $0x1f8] sm:$0xff]
    %v221 = vlaneseq
    %v222 = vshrl.u32 %v221, 7
    %v223 = vsub.s32 0, %v222
    %v224 = vrot.slane %v37, %v223
    %v225 = vlaneseq
    %v226 = vshrl.u32 %v225, 7
    %v227 = vsub.s32 1, %v226
    %v228 = vrot.slane %v37, %v227
    %231 = vmatprep.subr.mxu0 %v187
    %232 = vmatpush1.msra.mxu0 %v186
    %233 = vmatprep.subr.mxu0 %v185
    %234 = vmatpush1.msra.mxu0 %v184
    %235 = vmatprep.subr.mxu0 %v183
    %236 = vmatpush1.msra.mxu0 %v182
    %237 = vmatprep.subr.mxu0 %v181
    %238 = vmatpush1.msra.mxu0 %v180
    %239 = vmatprep.subr.mxu0 %v179
    %240 = vmatpush1.msra.mxu0 %v178
    %241 = vmatprep.subr.mxu0 %v177
    %242 = vmatpush1.msra.mxu0 %v176
    %243 = vmatprep.subr.mxu0 %v175
    %244 = vmatpush1.msra.mxu0 %v174
    %245 = vmatprep.subr.mxu0 %v173
    %246 = vmatpush1.msra.mxu0 %v172
    %247 = vmatprep.subr.mxu0 %v171
    %248 = vmatpush1.msra.mxu0 %v170
    %249 = vmatprep.subr.mxu0 %v169
    %250 = vmatpush1.msra.mxu0 %v168
    %251 = vmatprep.subr.mxu0 %v167
    %252 = vmatpush1.msra.mxu0 %v166
    %253 = vmatprep.subr.mxu0 %v165
    %254 = vmatpush1.msra.mxu0 %v164
    %255 = vmatprep.subr.mxu0 %v163
    %256 = vmatpush1.msra.mxu0 %v162
    %257 = vmatprep.subr.mxu0 %v161
    %258 = vmatpush1.msra.mxu0 %v160
    %259 = vmatprep.subr.mxu0 %v159
    %260 = vmatpush1.msra.mxu0 %v158
    %261 = vmatprep.subr.mxu0 %v157
    %262 = vmatpush1.msra.mxu0 %v156
    %263 = vmatprep.subr.mxu0 %v219
    %264 = vmatpush2.msra.mxu0 %v218
    %265 = vmatprep.subr.mxu0 %v217
    %266 = vmatpush2.msra.mxu0 %v216
    %267 = vmatprep.subr.mxu0 %v215
    %268 = vmatpush2.msra.mxu0 %v214
    %269 = vmatprep.subr.mxu0 %v213
    %270 = vmatpush2.msra.mxu0 %v212
    %271 = vmatprep.subr.mxu0 %v211
    %272 = vmatpush2.msra.mxu0 %v210
    %273 = vmatprep.subr.mxu0 %v209
    %274 = vmatpush2.msra.mxu0 %v208
    %275 = vmatprep.subr.mxu0 %v207
    %276 = vmatpush2.msra.mxu0 %v206
    %277 = vmatprep.subr.mxu0 %v205
    %278 = vmatpush2.msra.mxu0 %v204
    %279 = vmatprep.subr.mxu0 %v203
    %280 = vmatpush2.msra.mxu0 %v202
    %281 = vmatprep.subr.mxu0 %v201
    %282 = vmatpush2.msra.mxu0 %v200
    %283 = vmatprep.subr.mxu0 %v199
    %284 = vmatpush2.msra.mxu0 %v198
    %285 = vmatprep.subr.mxu0 %v197
    %286 = vmatpush2.msra.mxu0 %v196
    %287 = vmatprep.subr.mxu0 %v195
    %288 = vmatpush2.msra.mxu0 %v194
    %289 = vmatprep.subr.mxu0 %v193
    %290 = vmatpush2.msra.mxu0 %v192
    %291 = vmatprep.subr.mxu0 %v191
    %292 = vmatpush2.msra.mxu0 %v190
    %293 = vmatprep.subr.mxu0 %v189
    %294 = vmatpush2.msra.mxu0 %v188
    %295 = vmatprep.mubr.f32.mxu0 %v155
    %296 = vmatmul.mubr.f32.gmra.mxu0 %v154
    %v297 = vpop.f32.mrf.mxu0
    %v298 = vadd.f32 %v224, %v297
    %v299 = vpop.f32.mrf.mxu0
    %v300 = vadd.f32 %v228, %v299
    %301 = vdwg.mxu0
    %v302 = vmax.f32 %v298, 0.0
    %v303 = vmax.f32 %v300, 0.0
    %v304 = vld [vmem:[%s3] sm:$0xff]
    %v305 = vld [vmem:[%s3 + $0x8] sm:$0xff]
    %v306 = vld [vmem:[%s3 + $0x10] sm:$0xff]
    %v307 = vld [vmem:[%s3 + $0x18] sm:$0xff]
    %v308 = vld [vmem:[%s3 + $0x20] sm:$0xff]
    %v309 = vld [vmem:[%s3 + $0x28] sm:$0xff]
    %v310 = vld [vmem:[%s3 + $0x30] sm:$0xff]
    %v311 = vld [vmem:[%s3 + $0x38] sm:$0xff]
    %v312 = vld [vmem:[%s3 + $0x40] sm:$0xff]
    %v313 = vld [vmem:[%s3 + $0x48] sm:$0xff]
    %v314 = vld [vmem:[%s3 + $0x50] sm:$0xff]
    %v315 = vld [vmem:[%s3 + $0x58] sm:$0xff]
    %v316 = vld [vmem:[%s3 + $0x60] sm:$0xff]
    %v317 = vld [vmem:[%s3 + $0x68] sm:$0xff]
    %v318 = vld [vmem:[%s3 + $0x70] sm:$0xff]
    %v319 = vld [vmem:[%s3 + $0x78] sm:$0xff]
    %v320 = vld [vmem:[%s3 + $0x80] sm:$0xff]
    %v321 = vld [vmem:[%s3 + $0x88] sm:$0xff]
    %v322 = vld [vmem:[%s3 + $0x90] sm:$0xff]
    %v323 = vld [vmem:[%s3 + $0x98] sm:$0xff]
    %v324 = vld [vmem:[%s3 + $0xa0] sm:$0xff]
    %v325 = vld [vmem:[%s3 + $0xa8] sm:$0xff]
    %v326 = vld [vmem:[%s3 + $0xb0] sm:$0xff]
    %v327 = vld [vmem:[%s3 + $0xb8] sm:$0xff]
    %v328 = vld [vmem:[%s3 + $0xc0] sm:$0xff]
    %v329 = vld [vmem:[%s3 + $0xc8] sm:$0xff]
    %v330 = vld [vmem:[%s3 + $0xd0] sm:$0xff]
    %v331 = vld [vmem:[%s3 + $0xd8] sm:$0xff]
    %v332 = vld [vmem:[%s3 + $0xe0] sm:$0xff]
    %v333 = vld [vmem:[%s3 + $0xe8] sm:$0xff]
    %v334 = vld [vmem:[%s3 + $0xf0] sm:$0xff]
    %v335 = vld [vmem:[%s3 + $0xf8] sm:$0xff]
    %s337 = vtos %v38
    %v338 = vstv %s337
    %340 = vmatprep.subr.mxu0 0.0
    %341 = vmatpush1.msra.mxu0 %v319
    %342 = vmatprep.subr.mxu0 0.0
    %343 = vmatpush1.msra.mxu0 %v318
    %344 = vmatprep.subr.mxu0 0.0
    %345 = vmatpush1.msra.mxu0 %v317
    %346 = vmatprep.subr.mxu0 0.0
    %347 = vmatpush1.msra.mxu0 %v316
    %348 = vmatprep.subr.mxu0 0.0
    %349 = vmatpush1.msra.mxu0 %v315
    %350 = vmatprep.subr.mxu0 0.0
    %351 = vmatpush1.msra.mxu0 %v314
    %352 = vmatprep.subr.mxu0 0.0
    %353 = vmatpush1.msra.mxu0 %v313
    %354 = vmatprep.subr.mxu0 0.0
    %355 = vmatpush1.msra.mxu0 %v312
    %356 = vmatprep.subr.mxu0 0.0
    %357 = vmatpush1.msra.mxu0 %v311
    %358 = vmatprep.subr.mxu0 0.0
    %359 = vmatpush1.msra.mxu0 %v310
    %360 = vmatprep.subr.mxu0 0.0
    %361 = vmatpush1.msra.mxu0 %v309
    %362 = vmatprep.subr.mxu0 0.0
    %363 = vmatpush1.msra.mxu0 %v308
    %364 = vmatprep.subr.mxu0 0.0
    %365 = vmatpush1.msra.mxu0 %v307
    %366 = vmatprep.subr.mxu0 0.0
    %367 = vmatpush1.msra.mxu0 %v306
    %368 = vmatprep.subr.mxu0 0.0
    %369 = vmatpush1.msra.mxu0 %v305
    %370 = vmatprep.subr.mxu0 0.0
    %371 = vmatpush1.msra.mxu0 %v304
    %372 = vmatprep.subr.mxu0 0.0
    %373 = vmatpush2.msra.mxu0 %v335
    %374 = vmatprep.subr.mxu0 0.0
    %375 = vmatpush2.msra.mxu0 %v334
    %376 = vmatprep.subr.mxu0 0.0
    %377 = vmatpush2.msra.mxu0 %v333
    %378 = vmatprep.subr.mxu0 0.0
    %379 = vmatpush2.msra.mxu0 %v332
    %380 = vmatprep.subr.mxu0 0.0
    %381 = vmatpush2.msra.mxu0 %v331
    %382 = vmatprep.subr.mxu0 0.0
    %383 = vmatpush2.msra.mxu0 %v330
    %384 = vmatprep.subr.mxu0 0.0
    %385 = vmatpush2.msra.mxu0 %v329
    %386 = vmatprep.subr.mxu0 0.0
    %387 = vmatpush2.msra.mxu0 %v328
    %388 = vmatprep.subr.mxu0 0.0
    %389 = vmatpush2.msra.mxu0 %v327
    %390 = vmatprep.subr.mxu0 0.0
    %391 = vmatpush2.msra.mxu0 %v326
    %392 = vmatprep.subr.mxu0 0.0
    %393 = vmatpush2.msra.mxu0 %v325
    %394 = vmatprep.subr.mxu0 0.0
    %395 = vmatpush2.msra.mxu0 %v324
    %396 = vmatprep.subr.mxu0 0.0
    %397 = vmatpush2.msra.mxu0 %v323
    %398 = vmatprep.subr.mxu0 0.0
    %399 = vmatpush2.msra.mxu0 %v322
    %400 = vmatprep.subr.mxu0 0.0
    %401 = vmatpush2.msra.mxu0 %v321
    %402 = vmatprep.subr.mxu0 0.0
    %403 = vmatpush2.msra.mxu0 %v320
    %404 = vmatprep.mubr.f32.mxu0 %v303
    %405 = vmatmul.mubr.f32.gmra.mxu0 %v302
    %v406 = vpop.f32.mrf.mxu0
    %v407 = vadd.f32 %v338, %v406
    %v408 = vpop.f32.mrf.mxu0
    %409 = vdwg.mxu0
    %vm410 = vcmask 64512
    %411 = vst.msk [vmem:[#allocation5] sm:$0xff] %vm410, %v407
    // Predicated region
    $region26: #{tpu_custom_call.1} parent=1 // pred_check
      _
    $region27: #{tpu_custom_call.1} parent=1 // pred_check_branch
      %413 = sbr.rel (0) target = $region29
    $region28: #{tpu_custom_call.1} parent=1 // pred_region
      %s415 = ssub.s32 128, 128
      %416 = vsyncadd [#allocation4], %s415
      %s418 = sshll.u32 [#allocation5], 4
      %s419 = int_to_ptr.vmem [resolvable:$true] %s418
      %421 = dma.vmem_to_hbm [thread:$0]  %s419, 128, %s5, [#allocation4]
    $region29: #{tpu_custom_call.1} parent=1 // pred_fallthru
      _
    // Predicated region
    $region30: #{tpu_custom_call.1} parent=1 // pred_check
      _
    $region31: #{tpu_custom_call.1} parent=1 // pred_check_branch
      %423 = sbr.rel (0) target = $region33
    $region32: #{tpu_custom_call.1} parent=1 // pred_region
      %424 = dma.done [#allocation4], 128
    $region33: #{tpu_custom_call.1} parent=1 // pred_fallthru
      _
    %425 = vsyncpa [#allocation3], 1
    %426 = vsyncpa [#allocation4], 1

</llo_original>
